<compile_context>
chip_gen: v5e
topology: v5e:2x2
jax: 0.10.0
libtpu: 0.0.40
codegen_flags: <defaults>
</compile_context>

<pallas_src>
import functools

import jax
import jax.numpy as jnp
from jax.experimental import pallas as pl
from jax.experimental.pallas import tpu as pltpu

_LANE = 128      # lane width of a vreg
_SUBLANE = 8     # sublane count of a vreg (f32)


def _round_up(n: int, m: int) -> int:
    return ((n + m - 1) // m) * m


def _vmem_capacity_bytes() -> int:
    """Trace-time VMEM capacity query; conservative (v7x) fallback."""
    try:
        info = pltpu.get_tpu_info()
        cap = getattr(info, "vmem_capacity_bytes", None)
        if cap:
            return int(cap)
    except Exception:
        pass
    return 64 * 1024 * 1024  # v7x per-TensorCore VMEM (smallest of the fleet)


def _pick_block_rows(rows: int, dim: int,
                     in_itemsize: int, out_itemsize: int) -> int:
    """Largest sublane-aligned row tile whose double-buffered footprint fits
    the per-generation VMEM budget, while keeping a few grid steps for
    pipelining / megacore sharding."""
    vmem_cap = _vmem_capacity_bytes()
    # ~1/4 of VMEM for the double-buffered activation tiles, capped at 32 MiB.
    # v7x (64 MiB) -> 16 MiB budget; v5e/v6e (128 MiB) -> 32 MiB budget.
    budget = min(vmem_cap // 4, 32 * 1024 * 1024)
    per_row = 2 * dim * (in_itemsize + out_itemsize)  # dbl-buffered in + out
    br = max(_SUBLANE, budget // max(per_row, 1))
    br = min(br, 2048)
    # Keep >= ~4 grid steps when there are enough rows (pipelining + 2 TCs on v7x).
    min_steps = 4
    if rows > min_steps * _SUBLANE:
        br = min(br, max(_SUBLANE, _round_up(pl.cdiv(rows, min_steps), _SUBLANE)))
    # Never make the block taller than one sublane-aligned cover of the rows.
    br = min(br, _round_up(rows, _SUBLANE))
    br = max(_SUBLANE, (br // _SUBLANE) * _SUBLANE)
    return br


def _rmsnorm_kernel(x_ref, w_ref, o_ref, *, eps: float, inv_dim: float):
    """Square, reduce over the lane axis, rsqrt, scale, weight multiply.

    Rows in the (possibly partial) last grid block that fall outside the real
    array are masked on writeback by Pallas, so any garbage they produce is
    harmless (rows are independent).
    """
    x_in = x_ref[...]                                  # (block_rows, dim)
    x = x_in if x_in.dtype == jnp.float32 else x_in.astype(jnp.float32)
    ms = jnp.sum(x * x, axis=-1, keepdims=True) * inv_dim
    inv = jax.lax.rsqrt(ms + eps)
    normed = x * inv
    if x_in.dtype != jnp.float32:
        # Match PyTorch semantics: .type_as(x) then promotion for the weight mult.
        # Skipped entirely (trace-time branch) for f32 inputs: saves 2 full-tile casts.
        normed = normed.astype(x_in.dtype).astype(jnp.float32)
    out = normed * w_ref[...]                          # weight pre-cast to f32 in wrapper
    o_ref[...] = out.astype(o_ref.dtype)


def rmsnorm(x: jax.Array, weight: jax.Array, eps: float = 1e-6) -> jax.Array:
    """RMSNorm over the last axis of x, matching the PyTorch module semantics."""
    dim = x.shape[-1]
    assert weight.shape == (dim,)
    lead_shape = x.shape[:-1]
    rows = 1
    for s in lead_shape:
        rows *= s

    # Output dtype follows PyTorch promotion of (input_dtype * weight_dtype).
    out_dtype = jnp.promote_types(x.dtype, weight.dtype)
    in_itemsize = jnp.dtype(x.dtype).itemsize
    out_itemsize = jnp.dtype(out_dtype).itemsize

    block_rows = _pick_block_rows(rows, dim, in_itemsize, out_itemsize)
    grid = (pl.cdiv(rows, block_rows),)

    # No padding / slicing of the activation: saves full extra HBM passes.
    x2d = x.reshape(rows, dim)
    # Hoist the weight cast out of the kernel (constant tile stays VMEM-resident).
    w2d = weight.astype(jnp.float32).reshape(1, dim)

    # Scoped-VMEM limit sized to the actual double-buffered footprint + headroom.
    per_row = 2 * dim * (in_itemsize + out_itemsize)
    footprint = per_row * block_rows + 4 * dim * 4     # + dbl-buffered f32 weight
    vmem_limit = int(min(_vmem_capacity_bytes(), footprint + 16 * 1024 * 1024))

    out2d = pl.pallas_call(
        functools.partial(_rmsnorm_kernel, eps=eps, inv_dim=1.0 / dim),
        out_shape=jax.ShapeDtypeStruct((rows, dim), out_dtype),
        grid_spec=pltpu.PrefetchScalarGridSpec(
            num_scalar_prefetch=0,
            grid=grid,
            in_specs=[
                pl.BlockSpec((block_rows, dim), lambda i: (i, 0)),
                pl.BlockSpec((1, dim), lambda i: (0, 0)),
            ],
            out_specs=pl.BlockSpec((block_rows, dim), lambda i: (i, 0)),
        ),
        compiler_params=pltpu.CompilerParams(
            dimension_semantics=("parallel",),
            vmem_limit_bytes=vmem_limit,
        ),
    )(x2d, w2d)

    return out2d.reshape(*lead_shape, dim)


def rmsnorm_ref(x, weight, eps=1e-6):
    xf = x.astype(jnp.float32)
    normed = xf * jax.lax.rsqrt(jnp.mean(xf * xf, axis=-1, keepdims=True) + eps)
    return normed.astype(x.dtype) * weight


if __name__ == "__main__":
    key = jax.random.PRNGKey(0)
    batch, seq, dim = 2, 8, 32

    x = jax.random.normal(key, (batch, seq, dim), dtype=jnp.float32)
    # Deterministic parameter init, matching nn.Parameter(torch.ones(dim)).
    weight = jnp.ones((dim,), dtype=jnp.float32)

    out = rmsnorm(x, weight, eps=1e-6)
    out = jax.block_until_ready(out)

    ref = rmsnorm_ref(x, weight, eps=1e-6)
    assert out.shape == x.shape
    assert out.dtype == ref.dtype
    assert jnp.allclose(out, ref, atol=1e-5, rtol=1e-5), "mismatch vs reference"

    print("KERNEL_OK")
</pallas_src>

<mosaic_0001>
module attributes {stable_mosaic.version = 11 : i64} {
  func.func @_rmsnorm_kernel(%arg0: i32, %arg1: memref<16x32xf32, #tpu.memory_space<vmem>>, %arg2: memref<1x32xf32, #tpu.memory_space<vmem>>, %arg3: memref<16x32xf32, #tpu.memory_space<vmem>>) attributes {dimension_semantics = [#tpu.dimension_semantics<parallel>], iteration_bounds = array<i64: 1>, scalar_prefetch = 0 : i64, scratch_operands = 0 : i64, tpu.core_type = #tpu.core_type<tc>, window_params = [{transform_indices = @transform_0, window_bounds = array<i64: 16, 32>}, {pipeline_mode = #tpu.pipeline_mode<synchronous>, transform_indices = @transform_1, window_bounds = array<i64: 1, 32>}, {transform_indices = @transform_2, window_bounds = array<i64: 16, 32>}]} {
    %c0 = arith.constant 0 : index
    %c0_0 = arith.constant 0 : index
    %0 = vector.load %arg1[%c0, %c0_0] : memref<16x32xf32, #tpu.memory_space<vmem>>, vector<16x32xf32>
    %1 = arith.mulf %0, %0 : vector<16x32xf32>
    %cst = arith.constant dense<0.000000e+00> : vector<16xf32>
    %2 = vector.multi_reduction <add>, %1, %cst [1] : vector<16x32xf32> to vector<16xf32>
    %3 = vector.shape_cast %2 : vector<16xf32> to vector<16x1xf32>
    %cst_1 = arith.constant 3.125000e-02 : f32
    %4 = vector.broadcast %cst_1 : f32 to vector<16x1xf32>
    %5 = arith.mulf %3, %4 : vector<16x1xf32>
    %cst_2 = arith.constant 9.99999997E-7 : f32
    %6 = vector.broadcast %cst_2 : f32 to vector<16x1xf32>
    %7 = arith.addf %5, %6 : vector<16x1xf32>
    %8 = math.rsqrt %7 : vector<16x1xf32>
    %9 = vector.broadcast %8 : vector<16x1xf32> to vector<16x32xf32>
    %10 = arith.mulf %0, %9 : vector<16x32xf32>
    %c0_3 = arith.constant 0 : index
    %c0_4 = arith.constant 0 : index
    %11 = vector.load %arg2[%c0_3, %c0_4] : memref<1x32xf32, #tpu.memory_space<vmem>>, vector<1x32xf32>
    %12 = vector.broadcast %11 : vector<1x32xf32> to vector<16x32xf32>
    %13 = arith.mulf %10, %12 : vector<16x32xf32>
    %c0_5 = arith.constant 0 : index
    %c0_6 = arith.constant 0 : index
    %14 = vector.load %arg3[%c0_5, %c0_6] : memref<16x32xf32, #tpu.memory_space<vmem>>, vector<16x32xf32>
    tpu.vector_store %arg3[%c0_5, %c0_6], %13 {strides = array<i32>} : memref<16x32xf32, #tpu.memory_space<vmem>>, vector<16x32xf32>,
    return
  }
  func.func @transform_0(%arg0: i32) -> (i32, i32) {
    %c0_i32 = arith.constant 0 : i32
    %c0_i32_0 = arith.constant 0 : i32
    return %arg0, %c0_i32 : i32, i32
  }
  func.func @transform_1(%arg0: i32) -> (i32, i32) {
    %c0_i32 = arith.constant 0 : i32
    %c0_i32_0 = arith.constant 0 : i32
    %c0_i32_1 = arith.constant 0 : i32
    return %c0_i32, %c0_i32_0 : i32, i32
  }
  func.func @transform_2(%arg0: i32) -> (i32, i32) {
    %c0_i32 = arith.constant 0 : i32
    %c0_i32_0 = arith.constant 0 : i32
    return %arg0, %c0_i32 : i32, i32
  }
}

</mosaic_0001>

<llo_original>
// kernel: tpu_custom_call.1
$region0: #{tpu_custom_call.1}
  #allocation0 [shape = 'u32[]', space=smem, size = 0x4, offset = 0x4, fixed_abs, tag = 'smem constant byte address 0x4 - core index']
  #allocation1 [shape = 'u32[72,128]{1,0:T(1,128)}', space=vmem, size = 0x9000, scoped, tag = 'internal scratch']
  %s0 = inlined_call_operand.hbm [shape: f32[16,32], index: 0, kind: input, shape index: {}]
  %s1 = inlined_call_operand.hbm [shape: f32[1,32], index: 1, kind: input, shape index: {}]
  %s2 = inlined_call_operand.hbm [shape: f32[16,32], index: 2, kind: output, shape index: {}]
  %s3 = sld [smem:[#allocation0]]
  $region26: #{tpu_custom_call.1} parent=0
    _
  %s5 = ssub.s32 1, %s3
  %s6 = scalar_select 0, %s5, %s3
  $region1: #{tpu_custom_call.1} parent=0
    #allocation2 [shape = 'u8[8192]{0}', space=vmem, size = 0x2000, scoped, tag = 'input window, operand 0, single buffered']
    #allocation3 [shape = 's32[1]{0}', space=sflag, size = 0x4, scoped, tag = 'scoped memory for tpu_custom_call.1']
    #allocation4 [shape = 's32[1]{0}', space=sflag, size = 0x4, scoped, tag = 'scoped memory for tpu_custom_call.1']
    #allocation5 [shape = 'u8[512]{0}', space=vmem, size = 0x400, scoped, tag = 'input window, operand 1, single buffered']
    #allocation6 [shape = 's32[1]{0}', space=sflag, size = 0x4, scoped, tag = 'scoped memory for tpu_custom_call.1']
    #allocation7 [shape = 'u8[8192]{0}', space=vmem, size = 0x2000, scoped, tag = 'output window, operand 0, single buffered']
    %7 = vsyncpa [#allocation3], 0
    %8 = vsyncpa [#allocation6], 0
    %9 = vsyncpa [#allocation4], 0
    // Predicated region
    $region2: #{tpu_custom_call.1} parent=1 // pred_check
      _
    $region3: #{tpu_custom_call.1} parent=1 // pred_check_branch
      %11 = sbr.rel (0) target = $region5
    $region4: #{tpu_custom_call.1} parent=1 // pred_region
      %13 = vsyncadd [#allocation3], 0
      %s14 = sshll.u32 %s0, 4
      %s15 = int_to_ptr.hbm [resolvable:$true] %s14
      %s16 = sshll.u32 [#allocation2], 4
      %s17 = int_to_ptr.vmem [resolvable:$true] %s16
      %22 = dma.hbm_to_vmem [thread:$0]  %s15, 256, %s17, [#allocation3], 128, 128, 8
    $region5: #{tpu_custom_call.1} parent=1 // pred_fallthru
      _
    // Predicated region
    $region6: #{tpu_custom_call.1} parent=1 // pred_check
      _
    $region7: #{tpu_custom_call.1} parent=1 // pred_check_branch
      %24 = sbr.rel (0) target = $region9
    $region8: #{tpu_custom_call.1} parent=1 // pred_region
      %26 = vsyncadd [#allocation6], 0
      %s28 = sshll.u32 %s1, 4
      %s29 = int_to_ptr.hbm [resolvable:$true] %s28
      %s30 = sshll.u32 [#allocation5], 4
      %s31 = int_to_ptr.vmem [resolvable:$true] %s30
      %33 = dma.hbm_to_vmem [thread:$0]  %s29, 16, %s31, [#allocation6]
    $region9: #{tpu_custom_call.1} parent=1 // pred_fallthru
      _
    // Predicated region
    $region10: #{tpu_custom_call.1} parent=1 // pred_check
      _
    $region11: #{tpu_custom_call.1} parent=1 // pred_check_branch
      %35 = sbr.rel (0) target = $region13
    $region12: #{tpu_custom_call.1} parent=1 // pred_region
      %37 = dma.done [#allocation3], 256
    $region13: #{tpu_custom_call.1} parent=1 // pred_fallthru
      _
    // Predicated region
    $region14: #{tpu_custom_call.1} parent=1 // pred_check
      _
    $region15: #{tpu_custom_call.1} parent=1 // pred_check_branch
      %39 = sbr.rel (0) target = $region17
    $region16: #{tpu_custom_call.1} parent=1 // pred_region
      %41 = dma.done [#allocation6], 16
    $region17: #{tpu_custom_call.1} parent=1 // pred_fallthru
      _
    %v42 = vld [vmem:[#allocation2] sm:$0xff]
    %v43 = vld [vmem:[#allocation2 + $0x8] sm:$0xff]
    %v44 = vmul.f32 %v42, %v42
    %v45 = vmul.f32 %v43, %v43
    %vm46 = vcmask 261120
    %v47 = vsel %vm46, %v44, 0.0
    %48 = vadd.xlane.f32.xlu0 %v47
    %v49 = vpop.xlane.xlu0 %48
    %v50 = vsel %vm46, %v45, 0.0
    %51 = vadd.xlane.f32.xlu0 %v50
    %v52 = vpop.xlane.xlu0 %51
    %v53 = vmul.f32 %v49, 0.03125
    %v54 = vmul.f32 %v52, 0.03125
    %v55 = vadd.f32 %v53, 1e-06
    %v56 = vadd.f32 %v54, 1e-06
    %v57 = vrsqrt.pop %v55
    %v58 = vmul.f32 %v57, %v55
    %v59 = vmul.f32 %v58, %v57
    %v60 = vmul.f32 0.5, %v59
    %v61 = vsub.f32 1.5, %v60
    %v62 = vmul.f32 %v57, %v61
    %vm63 = vweird.f32 %v55
    %vm64 = vweird.f32 %v57
    %vm65 = vmor %vm63, %vm64
    %v66 = vsel %vm65, %v57, %v62
    %v67 = vrsqrt.pop %v56
    %v68 = vmul.f32 %v67, %v56
    %v69 = vmul.f32 %v68, %v67
    %v70 = vmul.f32 0.5, %v69
    %v71 = vsub.f32 1.5, %v70
    %v72 = vmul.f32 %v67, %v71
    %vm73 = vweird.f32 %v56
    %vm74 = vweird.f32 %v67
    %vm75 = vmor %vm73, %vm74
    %v76 = vsel %vm75, %v67, %v72
    %v77 = vmul.f32 %v42, %v66
    %v78 = vmul.f32 %v43, %v76
    %v79 = vld [vmem:[#allocation5] sm:$0x1]
    %v81 = vperm.slane %v79, 0
    %v83 = vmul.f32 %v77, %v81
    %v84 = vmul.f32 %v78, %v81
    %85 = vst.msk [vmem:[#allocation7] sm:$0xff] %vm46, %v83
    %86 = vst.msk [vmem:[#allocation7 + $0x8] sm:$0xff] %vm46, %v84
    // Predicated region
    $region18: #{tpu_custom_call.1} parent=1 // pred_check
      _
    $region19: #{tpu_custom_call.1} parent=1 // pred_check_branch
      %88 = sbr.rel (0) target = $region21
    $region20: #{tpu_custom_call.1} parent=1 // pred_region
      %90 = vsyncadd [#allocation4], 0
      %s91 = sshll.u32 [#allocation7], 4
      %s92 = int_to_ptr.vmem [resolvable:$true] %s91
      %s93 = sshll.u32 %s2, 4
      %s94 = int_to_ptr.hbm [resolvable:$true] %s93
      %99 = dma.vmem_to_hbm [thread:$0]  %s92, 256, %s94, [#allocation4], 128, 128, 8
    $region21: #{tpu_custom_call.1} parent=1 // pred_fallthru
      _
    // Predicated region
    $region22: #{tpu_custom_call.1} parent=1 // pred_check
      _
    $region23: #{tpu_custom_call.1} parent=1 // pred_check_branch
      %101 = sbr.rel (0) target = $region25
    $region24: #{tpu_custom_call.1} parent=1 // pred_region
      %103 = dma.done [#allocation4], 256
    $region25: #{tpu_custom_call.1} parent=1 // pred_fallthru
      _
    %104 = vsyncpa [#allocation3], 1
    %105 = vsyncpa [#allocation6], 1
    %106 = vsyncpa [#allocation4], 1

</llo_original>
